<compile_context>
chip_gen: v5e
topology: v5e:2x2
jax: 0.10.0
libtpu: 0.0.40
codegen_flags: <defaults>
</compile_context>

<pallas_src>
import jax
import jax.numpy as jnp
from jax.experimental import pallas as pl
from jax.experimental.pallas import tpu as pltpu


def _conv1x1_kernel_2d(w_ref, x_ref, o_ref):
    # w_ref: (C_out, C_in), x_ref: (C_in, HW), o_ref: (C_out, HW).
    # Whole arrays are VMEM-resident (<0.5 MB padded); single MXU matmul with
    # C_out=232 on the MXU row axis and C_in=232 contracted.
    o_ref[...] = jnp.dot(
        w_ref[...], x_ref[...], preferred_element_type=jnp.float32
    ).astype(o_ref.dtype)


def _conv1x1_kernel_batched(w_ref, x_ref, o_ref):
    # w_ref: (C_out, C_in), x_ref: (1, C_in, HW), o_ref: (1, C_out, HW).
    # One batch element per grid step ("parallel" axis -> megacore on v7x).
    o_ref[0] = jnp.dot(
        w_ref[...], x_ref[0], preferred_element_type=jnp.float32
    ).astype(o_ref.dtype)


def conv2d_1x1(x_nchw, weight_oihw):
    """1x1 conv, stride 1, no bias. x: [N, C_in, H, W], weight: [C_out, C_in, 1, 1]."""
    n, c_in, h, w = x_nchw.shape
    c_out = weight_oihw.shape[0]
    hw = h * w

    # Contiguous reshapes only (no transposes, no copies).
    w2 = weight_oihw.reshape(c_out, c_in)  # [C_out, C_in]

    itemsize = jnp.dtype(x_nchw.dtype).itemsize
    cost = pl.CostEstimate(
        flops=2 * n * c_out * c_in * hw,
        bytes_accessed=(c_out * c_in + n * c_in * hw + n * c_out * hw) * itemsize,
        transcendentals=0,
    )

    if n == 1:
        # Grid-less single invocation: no per-step pipeline overhead.
        x2 = x_nchw.reshape(c_in, hw)  # contiguous for N=1
        out2 = pl.pallas_call(
            _conv1x1_kernel_2d,
            out_shape=jax.ShapeDtypeStruct((c_out, hw), x_nchw.dtype),
            in_specs=[
                pl.BlockSpec(memory_space=pltpu.MemorySpace.VMEM),  # weight
                pl.BlockSpec(memory_space=pltpu.MemorySpace.VMEM),  # activations
            ],
            out_specs=pl.BlockSpec(memory_space=pltpu.MemorySpace.VMEM),
            cost_estimate=cost,
        )(w2, x2)
        return out2.reshape(n, c_out, h, w)

    # N > 1: one batch element per grid step; weight stays resident, batches
    # are double-buffered by the BlockSpec pipeline and shard across TCs on v7x.
    x3 = x_nchw.reshape(n, c_in, hw)
    out3 = pl.pallas_call(
        _conv1x1_kernel_batched,
        out_shape=jax.ShapeDtypeStruct((n, c_out, hw), x_nchw.dtype),
        grid=(n,),
        in_specs=[
            pl.BlockSpec((c_out, c_in), lambda i: (0, 0)),   # weight (whole)
            pl.BlockSpec((1, c_in, hw), lambda i: (i, 0, 0)),  # per-batch slab
        ],
        out_specs=pl.BlockSpec((1, c_out, hw), lambda i: (i, 0, 0)),
        compiler_params=pltpu.CompilerParams(dimension_semantics=("parallel",)),
        cost_estimate=cost,
    )(w2, x3)
    return out3.reshape(n, c_out, h, w)


def reference_conv2d_1x1(x_nchw, weight_oihw):
    # Pure-JAX reference (matches torch.nn.Conv2d 1x1, stride 1, no bias).
    return jax.lax.conv_general_dilated(
        x_nchw, weight_oihw,
        window_strides=(1, 1), padding="VALID",
        dimension_numbers=("NCHW", "OIHW", "NCHW"),
    )


if __name__ == "__main__":
    key = jax.random.PRNGKey(0)
    kx, kw = jax.random.split(key)

    # Shapes from the module: input [1, 232, 7, 7], weight [232, 232, 1, 1]
    N, C_IN, H, W = 1, 232, 7, 7
    C_OUT = 232

    x = jax.random.normal(kx, (N, C_IN, H, W), dtype=jnp.float32)
    # Deterministic synthetic weight (Conv2d default-init-like scale)
    weight = jax.random.normal(kw, (C_OUT, C_IN, 1, 1), dtype=jnp.float32) * 0.05

    out = conv2d_1x1(x, weight)
    out = jax.block_until_ready(out)

    ref = jax.block_until_ready(reference_conv2d_1x1(x, weight))
    assert out.shape == (N, C_OUT, H, W), out.shape
    assert jnp.allclose(out, ref, atol=1e-4, rtol=1e-4), "mismatch vs reference"

    print("KERNEL_OK")
</pallas_src>

<mosaic_0001>
module attributes {stable_mosaic.version = 11 : i64} {
  func.func @_conv1x1_kernel_2d(%arg0: memref<232x232xf32, #tpu.memory_space<vmem>>, %arg1: memref<232x49xf32, #tpu.memory_space<vmem>>, %arg2: memref<232x49xf32, #tpu.memory_space<vmem>>) attributes {dimension_semantics = [], scalar_prefetch = 0 : i64, scratch_operands = 0 : i64, tpu.core_type = #tpu.core_type<tc>} {
    %c0 = arith.constant 0 : index
    %c0_0 = arith.constant 0 : index
    %0 = vector.load %arg0[%c0, %c0_0] : memref<232x232xf32, #tpu.memory_space<vmem>>, vector<232x232xf32>
    %c0_1 = arith.constant 0 : index
    %c0_2 = arith.constant 0 : index
    %1 = vector.load %arg1[%c0_1, %c0_2] : memref<232x49xf32, #tpu.memory_space<vmem>>, vector<232x49xf32>
    %cst = arith.constant dense<0.000000e+00> : vector<232x49xf32>
    %2 = tpu.matmul %0, %1, %cst {dimension_numbers = #tpu.dot_dimension_numbers<[1], [0], [0], [1], [0, 0, 1, 1], [], []>} : vector<232x232xf32>, vector<232x49xf32>, vector<232x49xf32> -> vector<232x49xf32>
    %c0_3 = arith.constant 0 : index
    %c0_4 = arith.constant 0 : index
    %3 = vector.load %arg2[%c0_3, %c0_4] : memref<232x49xf32, #tpu.memory_space<vmem>>, vector<232x49xf32>
    tpu.vector_store %arg2[%c0_3, %c0_4], %2 {strides = array<i32>} : memref<232x49xf32, #tpu.memory_space<vmem>>, vector<232x49xf32>,
    return
  }
}

</mosaic_0001>

<llo_original>
// kernel: tpu_custom_call.1
$region0: #{tpu_custom_call.1}
  #allocation0 [shape = 'u32[]', space=smem, size = 0x4, offset = 0x4, fixed_abs, tag = 'smem constant byte address 0x4 - core index']
  #allocation1 [shape = 'u32[72,128]{1,0:T(1,128)}', space=vmem, size = 0x9000, scoped, tag = 'internal scratch']
  %s0 = inlined_call_operand.hbm [shape: f32[232,232], index: 0, kind: input, shape index: {}]
  %s1 = inlined_call_operand.vmem [shape: f32[232,49], index: 1, kind: input, shape index: {}]
  %s2 = inlined_call_operand.vmem [shape: f32[232,49], index: 2, kind: output, shape index: {}]
  %s3 = sld [smem:[#allocation0]]
  $region22: #{tpu_custom_call.1} parent=0
    _
  %s5 = ssub.s32 1, %s3
  %s6 = scalar_select 0, %s5, %s3
  $region1: #{tpu_custom_call.1} parent=0
    #allocation2 [shape = 'u8[237568]{0}', space=vmem, size = 0x3a000, scoped, tag = 'input window, operand 0, single buffered']
    #allocation3 [shape = 's32[1]{0}', space=sflag, size = 0x4, scoped, tag = 'scoped memory for tpu_custom_call.1']
    %7 = vsyncpa [#allocation3], 0
    // Predicated region
    $region2: #{tpu_custom_call.1} parent=1 // pred_check
      _
    $region3: #{tpu_custom_call.1} parent=1 // pred_check_branch
      %9 = sbr.rel (0) target = $region5
    $region4: #{tpu_custom_call.1} parent=1 // pred_region
      %11 = vsyncadd [#allocation3], 0
      %s12 = sshll.u32 %s0, 4
      %s13 = int_to_ptr.hbm [resolvable:$true] %s12
      %s14 = sshll.u32 [#allocation2], 4
      %s15 = int_to_ptr.vmem [resolvable:$true] %s14
      %20 = dma.hbm_to_vmem [thread:$0]  %s13, 7424, %s15, [#allocation3], 256, 256, 16
    $region5: #{tpu_custom_call.1} parent=1 // pred_fallthru
      _
    // Predicated region
    $region6: #{tpu_custom_call.1} parent=1 // pred_check
      _
    $region7: #{tpu_custom_call.1} parent=1 // pred_check_branch
      %22 = sbr.rel (0) target = $region9
    $region8: #{tpu_custom_call.1} parent=1 // pred_region
      _
    $region9: #{tpu_custom_call.1} parent=1 // pred_fallthru
      _
    // Predicated region
    $region10: #{tpu_custom_call.1} parent=1 // pred_check
      _
    $region11: #{tpu_custom_call.1} parent=1 // pred_check_branch
      %24 = sbr.rel (0) target = $region13
    $region12: #{tpu_custom_call.1} parent=1 // pred_region
      %26 = dma.done [#allocation3], 7424
    $region13: #{tpu_custom_call.1} parent=1 // pred_fallthru
      _
    %v27 = vld [vmem:[#allocation2] sm:$0xff]
    %v28 = vld [vmem:[#allocation2 + $0x8] sm:$0xff]
    %v29 = vld [vmem:[#allocation2 + $0x10] sm:$0xff]
    %v30 = vld [vmem:[#allocation2 + $0x18] sm:$0xff]
    %v31 = vld [vmem:[#allocation2 + $0x20] sm:$0xff]
    %v32 = vld [vmem:[#allocation2 + $0x28] sm:$0xff]
    %v33 = vld [vmem:[#allocation2 + $0x30] sm:$0xff]
    %v34 = vld [vmem:[#allocation2 + $0x38] sm:$0xff]
    %v35 = vld [vmem:[#allocation2 + $0x40] sm:$0xff]
    %v36 = vld [vmem:[#allocation2 + $0x48] sm:$0xff]
    %v37 = vld [vmem:[#allocation2 + $0x50] sm:$0xff]
    %v38 = vld [vmem:[#allocation2 + $0x58] sm:$0xff]
    %v39 = vld [vmem:[#allocation2 + $0x60] sm:$0xff]
    %v40 = vld [vmem:[#allocation2 + $0x68] sm:$0xff]
    %v41 = vld [vmem:[#allocation2 + $0x70] sm:$0xff]
    %v42 = vld [vmem:[#allocation2 + $0x78] sm:$0xff]
    %v43 = vld [vmem:[#allocation2 + $0x80] sm:$0xff]
    %v44 = vld [vmem:[#allocation2 + $0x88] sm:$0xff]
    %v45 = vld [vmem:[#allocation2 + $0x90] sm:$0xff]
    %v46 = vld [vmem:[#allocation2 + $0x98] sm:$0xff]
    %v47 = vld [vmem:[#allocation2 + $0xa0] sm:$0xff]
    %v48 = vld [vmem:[#allocation2 + $0xa8] sm:$0xff]
    %v49 = vld [vmem:[#allocation2 + $0xb0] sm:$0xff]
    %v50 = vld [vmem:[#allocation2 + $0xb8] sm:$0xff]
    %v51 = vld [vmem:[#allocation2 + $0xc0] sm:$0xff]
    %v52 = vld [vmem:[#allocation2 + $0xc8] sm:$0xff]
    %v53 = vld [vmem:[#allocation2 + $0xd0] sm:$0xff]
    %v54 = vld [vmem:[#allocation2 + $0xd8] sm:$0xff]
    %v55 = vld [vmem:[#allocation2 + $0xe0] sm:$0xff]
    %v56 = vld [vmem:[#allocation2 + $0xe8] sm:$0xff]
    %v57 = vld [vmem:[#allocation2 + $0xf0] sm:$0xff]
    %v58 = vld [vmem:[#allocation2 + $0xf8] sm:$0xff]
    %v59 = vld [vmem:[#allocation2 + $0x100] sm:$0xff]
    %v60 = vld [vmem:[#allocation2 + $0x108] sm:$0xff]
    %v61 = vld [vmem:[#allocation2 + $0x110] sm:$0xff]
    %v62 = vld [vmem:[#allocation2 + $0x118] sm:$0xff]
    %v63 = vld [vmem:[#allocation2 + $0x120] sm:$0xff]
    %v64 = vld [vmem:[#allocation2 + $0x128] sm:$0xff]
    %v65 = vld [vmem:[#allocation2 + $0x130] sm:$0xff]
    %v66 = vld [vmem:[#allocation2 + $0x138] sm:$0xff]
    %v67 = vld [vmem:[#allocation2 + $0x140] sm:$0xff]
    %v68 = vld [vmem:[#allocation2 + $0x148] sm:$0xff]
    %v69 = vld [vmem:[#allocation2 + $0x150] sm:$0xff]
    %v70 = vld [vmem:[#allocation2 + $0x158] sm:$0xff]
    %v71 = vld [vmem:[#allocation2 + $0x160] sm:$0xff]
    %v72 = vld [vmem:[#allocation2 + $0x168] sm:$0xff]
    %v73 = vld [vmem:[#allocation2 + $0x170] sm:$0xff]
    %v74 = vld [vmem:[#allocation2 + $0x178] sm:$0xff]
    %v75 = vld [vmem:[#allocation2 + $0x180] sm:$0xff]
    %v76 = vld [vmem:[#allocation2 + $0x188] sm:$0xff]
    %v77 = vld [vmem:[#allocation2 + $0x190] sm:$0xff]
    %v78 = vld [vmem:[#allocation2 + $0x198] sm:$0xff]
    %v79 = vld [vmem:[#allocation2 + $0x1a0] sm:$0xff]
    %v80 = vld [vmem:[#allocation2 + $0x1a8] sm:$0xff]
    %v81 = vld [vmem:[#allocation2 + $0x1b0] sm:$0xff]
    %v82 = vld [vmem:[#allocation2 + $0x1b8] sm:$0xff]
    %v83 = vld [vmem:[#allocation2 + $0x1c0] sm:$0xff]
    %v84 = vld [vmem:[#allocation2 + $0x1c8] sm:$0xff]
    %v85 = vld [vmem:[%s1] sm:$0xff]
    %v86 = vld [vmem:[%s1 + $0x8] sm:$0xff]
    %v87 = vld [vmem:[%s1 + $0x10] sm:$0xff]
    %v88 = vld [vmem:[%s1 + $0x18] sm:$0xff]
    %v89 = vld [vmem:[%s1 + $0x20] sm:$0xff]
    %v90 = vld [vmem:[%s1 + $0x28] sm:$0xff]
    %v91 = vld [vmem:[%s1 + $0x30] sm:$0xff]
    %v92 = vld [vmem:[%s1 + $0x38] sm:$0xff]
    %v93 = vld [vmem:[%s1 + $0x40] sm:$0xff]
    %v94 = vld [vmem:[%s1 + $0x48] sm:$0xff]
    %v95 = vld [vmem:[%s1 + $0x50] sm:$0xff]
    %v96 = vld [vmem:[%s1 + $0x58] sm:$0xff]
    %v97 = vld [vmem:[%s1 + $0x60] sm:$0xff]
    %v98 = vld [vmem:[%s1 + $0x68] sm:$0xff]
    %v99 = vld [vmem:[%s1 + $0x70] sm:$0xff]
    %v100 = vld [vmem:[%s1 + $0x78] sm:$0xff]
    %v101 = vld [vmem:[%s1 + $0x80] sm:$0xff]
    %v102 = vld [vmem:[%s1 + $0x88] sm:$0xff]
    %v103 = vld [vmem:[%s1 + $0x90] sm:$0xff]
    %v104 = vld [vmem:[%s1 + $0x98] sm:$0xff]
    %v105 = vld [vmem:[%s1 + $0xa0] sm:$0xff]
    %v106 = vld [vmem:[%s1 + $0xa8] sm:$0xff]
    %v107 = vld [vmem:[%s1 + $0xb0] sm:$0xff]
    %v108 = vld [vmem:[%s1 + $0xb8] sm:$0xff]
    %v109 = vld [vmem:[%s1 + $0xc0] sm:$0xff]
    %v110 = vld [vmem:[%s1 + $0xc8] sm:$0xff]
    %v111 = vld [vmem:[%s1 + $0xd0] sm:$0xff]
    %v112 = vld [vmem:[%s1 + $0xd8] sm:$0xff]
    %v113 = vld [vmem:[%s1 + $0xe0] sm:$0xff]
    %vm114 = vcmask 850944
    %v116 = vsel %vm114, %v28, 0
    %v119 = vsel %vm114, %v30, 0
    %v122 = vsel %vm114, %v32, 0
    %v125 = vsel %vm114, %v34, 0
    %v128 = vsel %vm114, %v36, 0
    %v131 = vsel %vm114, %v38, 0
    %v134 = vsel %vm114, %v40, 0
    %v137 = vsel %vm114, %v42, 0
    %v140 = vsel %vm114, %v44, 0
    %v143 = vsel %vm114, %v46, 0
    %v146 = vsel %vm114, %v48, 0
    %v149 = vsel %vm114, %v50, 0
    %v152 = vsel %vm114, %v52, 0
    %v155 = vsel %vm114, %v54, 0
    %v158 = vsel %vm114, %v56, 0
    %v161 = vsel %vm114, %v58, 0
    %v164 = vsel %vm114, %v60, 0
    %v167 = vsel %vm114, %v62, 0
    %v170 = vsel %vm114, %v64, 0
    %v173 = vsel %vm114, %v66, 0
    %v176 = vsel %vm114, %v68, 0
    %v179 = vsel %vm114, %v70, 0
    %v182 = vsel %vm114, %v72, 0
    %v185 = vsel %vm114, %v74, 0
    %v188 = vsel %vm114, %v76, 0
    %v191 = vsel %vm114, %v78, 0
    %v194 = vsel %vm114, %v80, 0
    %v197 = vsel %vm114, %v82, 0
    %v200 = vsel %vm114, %v84, 0
    %202 = vmatpush.msra.mxu0 %v100
    %203 = vmatpush.msra.mxu0 %v99
    %204 = vmatpush.msra.mxu0 %v98
    %205 = vmatpush.msra.mxu0 %v97
    %206 = vmatpush.msra.mxu0 %v96
    %207 = vmatpush.msra.mxu0 %v95
    %208 = vmatpush.msra.mxu0 %v94
    %209 = vmatpush.msra.mxu0 %v93
    %210 = vmatpush.msra.mxu0 %v92
    %211 = vmatpush.msra.mxu0 %v91
    %212 = vmatpush.msra.mxu0 %v90
    %213 = vmatpush.msra.mxu0 %v89
    %214 = vmatpush.msra.mxu0 %v88
    %215 = vmatpush.msra.mxu0 %v87
    %216 = vmatpush.msra.mxu0 %v86
    %217 = vmatpush.msra.mxu0 %v85
    %218 = vmatmul.f32.gmra.mxu0 %v27
    %v219 = vpop.f32.mrf.mxu0
    %v220 = vadd.f32 0.0, %v219
    %221 = vmatmul.f32.gmra.mxu0 %v29
    %v222 = vpop.f32.mrf.mxu0
    %v223 = vadd.f32 0.0, %v222
    %224 = vmatmul.f32.gmra.mxu0 %v31
    %v225 = vpop.f32.mrf.mxu0
    %v226 = vadd.f32 0.0, %v225
    %227 = vmatmul.f32.gmra.mxu0 %v33
    %v228 = vpop.f32.mrf.mxu0
    %v229 = vadd.f32 0.0, %v228
    %230 = vmatmul.f32.gmra.mxu0 %v35
    %v231 = vpop.f32.mrf.mxu0
    %v232 = vadd.f32 0.0, %v231
    %233 = vmatmul.f32.gmra.mxu0 %v37
    %v234 = vpop.f32.mrf.mxu0
    %v235 = vadd.f32 0.0, %v234
    %236 = vmatmul.f32.gmra.mxu0 %v39
    %v237 = vpop.f32.mrf.mxu0
    %v238 = vadd.f32 0.0, %v237
    %239 = vmatmul.f32.gmra.mxu0 %v41
    %v240 = vpop.f32.mrf.mxu0
    %v241 = vadd.f32 0.0, %v240
    %242 = vmatmul.f32.gmra.mxu0 %v43
    %v243 = vpop.f32.mrf.mxu0
    %v244 = vadd.f32 0.0, %v243
    %245 = vmatmul.f32.gmra.mxu0 %v45
    %v246 = vpop.f32.mrf.mxu0
    %v247 = vadd.f32 0.0, %v246
    %248 = vmatmul.f32.gmra.mxu0 %v47
    %v249 = vpop.f32.mrf.mxu0
    %v250 = vadd.f32 0.0, %v249
    %251 = vmatmul.f32.gmra.mxu0 %v49
    %v252 = vpop.f32.mrf.mxu0
    %v253 = vadd.f32 0.0, %v252
    %254 = vmatmul.f32.gmra.mxu0 %v51
    %v255 = vpop.f32.mrf.mxu0
    %v256 = vadd.f32 0.0, %v255
    %257 = vmatmul.f32.gmra.mxu0 %v53
    %v258 = vpop.f32.mrf.mxu0
    %v259 = vadd.f32 0.0, %v258
    %260 = vmatmul.f32.gmra.mxu0 %v55
    %v261 = vpop.f32.mrf.mxu0
    %v262 = vadd.f32 0.0, %v261
    %263 = vmatmul.f32.gmra.mxu0 %v57
    %v264 = vpop.f32.mrf.mxu0
    %v265 = vadd.f32 0.0, %v264
    %266 = vmatmul.f32.gmra.mxu0 %v59
    %v267 = vpop.f32.mrf.mxu0
    %v268 = vadd.f32 0.0, %v267
    %269 = vmatmul.f32.gmra.mxu0 %v61
    %v270 = vpop.f32.mrf.mxu0
    %v271 = vadd.f32 0.0, %v270
    %272 = vmatmul.f32.gmra.mxu0 %v63
    %v273 = vpop.f32.mrf.mxu0
    %v274 = vadd.f32 0.0, %v273
    %275 = vmatmul.f32.gmra.mxu0 %v65
    %v276 = vpop.f32.mrf.mxu0
    %v277 = vadd.f32 0.0, %v276
    %278 = vmatmul.f32.gmra.mxu0 %v67
    %v279 = vpop.f32.mrf.mxu0
    %v280 = vadd.f32 0.0, %v279
    %281 = vmatmul.f32.gmra.mxu0 %v69
    %v282 = vpop.f32.mrf.mxu0
    %v283 = vadd.f32 0.0, %v282
    %284 = vmatmul.f32.gmra.mxu0 %v71
    %v285 = vpop.f32.mrf.mxu0
    %v286 = vadd.f32 0.0, %v285
    %287 = vmatmul.f32.gmra.mxu0 %v73
    %v288 = vpop.f32.mrf.mxu0
    %v289 = vadd.f32 0.0, %v288
    %290 = vmatmul.f32.gmra.mxu0 %v75
    %v291 = vpop.f32.mrf.mxu0
    %v292 = vadd.f32 0.0, %v291
    %293 = vmatmul.f32.gmra.mxu0 %v77
    %v294 = vpop.f32.mrf.mxu0
    %v295 = vadd.f32 0.0, %v294
    %296 = vmatmul.f32.gmra.mxu0 %v79
    %v297 = vpop.f32.mrf.mxu0
    %v298 = vadd.f32 0.0, %v297
    %299 = vmatmul.f32.gmra.mxu0 %v81
    %v300 = vpop.f32.mrf.mxu0
    %v301 = vadd.f32 0.0, %v300
    %302 = vmatmul.f32.gmra.mxu0 %v83
    %v303 = vpop.f32.mrf.mxu0
    %v304 = vadd.f32 0.0, %v303
    %305 = vdwg.mxu0
    %306 = vmatpush.msra.mxu0 0.0
    %307 = vmatpush.msra.mxu0 0.0
    %308 = vmatpush.msra.mxu0 0.0
    %309 = vmatpush.msra.mxu0 %v113
    %310 = vmatpush.msra.mxu0 %v112
    %311 = vmatpush.msra.mxu0 %v111
    %312 = vmatpush.msra.mxu0 %v110
    %313 = vmatpush.msra.mxu0 %v109
    %314 = vmatpush.msra.mxu0 %v108
    %315 = vmatpush.msra.mxu0 %v107
    %316 = vmatpush.msra.mxu0 %v106
    %317 = vmatpush.msra.mxu0 %v105
    %318 = vmatpush.msra.mxu0 %v104
    %319 = vmatpush.msra.mxu0 %v103
    %320 = vmatpush.msra.mxu0 %v102
    %321 = vmatpush.msra.mxu0 %v101
    %322 = vmatmul.f32.gmra.mxu0 %v116
    %v323 = vpop.f32.mrf.mxu0
    %v324 = vadd.f32 %v220, %v323
    %325 = vmatmul.f32.gmra.mxu0 %v119
    %v326 = vpop.f32.mrf.mxu0
    %v327 = vadd.f32 %v223, %v326
    %328 = vmatmul.f32.gmra.mxu0 %v122
    %v329 = vpop.f32.mrf.mxu0
    %v330 = vadd.f32 %v226, %v329
    %331 = vmatmul.f32.gmra.mxu0 %v125
    %v332 = vpop.f32.mrf.mxu0
    %v333 = vadd.f32 %v229, %v332
    %334 = vmatmul.f32.gmra.mxu0 %v128
    %v335 = vpop.f32.mrf.mxu0
    %v336 = vadd.f32 %v232, %v335
    %337 = vmatmul.f32.gmra.mxu0 %v131
    %v338 = vpop.f32.mrf.mxu0
    %v339 = vadd.f32 %v235, %v338
    %340 = vmatmul.f32.gmra.mxu0 %v134
    %v341 = vpop.f32.mrf.mxu0
    %v342 = vadd.f32 %v238, %v341
    %343 = vmatmul.f32.gmra.mxu0 %v137
    %v344 = vpop.f32.mrf.mxu0
    %v345 = vadd.f32 %v241, %v344
    %346 = vmatmul.f32.gmra.mxu0 %v140
    %v347 = vpop.f32.mrf.mxu0
    %v348 = vadd.f32 %v244, %v347
    %349 = vmatmul.f32.gmra.mxu0 %v143
    %v350 = vpop.f32.mrf.mxu0
    %v351 = vadd.f32 %v247, %v350
    %352 = vmatmul.f32.gmra.mxu0 %v146
    %v353 = vpop.f32.mrf.mxu0
    %v354 = vadd.f32 %v250, %v353
    %355 = vmatmul.f32.gmra.mxu0 %v149
    %v356 = vpop.f32.mrf.mxu0
    %v357 = vadd.f32 %v253, %v356
    %358 = vmatmul.f32.gmra.mxu0 %v152
    %v359 = vpop.f32.mrf.mxu0
    %v360 = vadd.f32 %v256, %v359
    %361 = vmatmul.f32.gmra.mxu0 %v155
    %v362 = vpop.f32.mrf.mxu0
    %v363 = vadd.f32 %v259, %v362
    %364 = vmatmul.f32.gmra.mxu0 %v158
    %v365 = vpop.f32.mrf.mxu0
    %v366 = vadd.f32 %v262, %v365
    %367 = vmatmul.f32.gmra.mxu0 %v161
    %v368 = vpop.f32.mrf.mxu0
    %v369 = vadd.f32 %v265, %v368
    %370 = vmatmul.f32.gmra.mxu0 %v164
    %v371 = vpop.f32.mrf.mxu0
    %v372 = vadd.f32 %v268, %v371
    %373 = vmatmul.f32.gmra.mxu0 %v167
    %v374 = vpop.f32.mrf.mxu0
    %v375 = vadd.f32 %v271, %v374
    %376 = vmatmul.f32.gmra.mxu0 %v170
    %v377 = vpop.f32.mrf.mxu0
    %v378 = vadd.f32 %v274, %v377
    %379 = vmatmul.f32.gmra.mxu0 %v173
    %v380 = vpop.f32.mrf.mxu0
    %v381 = vadd.f32 %v277, %v380
    %382 = vmatmul.f32.gmra.mxu0 %v176
    %v383 = vpop.f32.mrf.mxu0
    %v384 = vadd.f32 %v280, %v383
    %385 = vmatmul.f32.gmra.mxu0 %v179
    %v386 = vpop.f32.mrf.mxu0
    %v387 = vadd.f32 %v283, %v386
    %388 = vmatmul.f32.gmra.mxu0 %v182
    %v389 = vpop.f32.mrf.mxu0
    %v390 = vadd.f32 %v286, %v389
    %391 = vmatmul.f32.gmra.mxu0 %v185
    %v392 = vpop.f32.mrf.mxu0
    %v393 = vadd.f32 %v289, %v392
    %394 = vmatmul.f32.gmra.mxu0 %v188
    %v395 = vpop.f32.mrf.mxu0
    %v396 = vadd.f32 %v292, %v395
    %397 = vmatmul.f32.gmra.mxu0 %v191
    %v398 = vpop.f32.mrf.mxu0
    %v399 = vadd.f32 %v295, %v398
    %400 = vmatmul.f32.gmra.mxu0 %v194
    %v401 = vpop.f32.mrf.mxu0
    %v402 = vadd.f32 %v298, %v401
    %403 = vmatmul.f32.gmra.mxu0 %v197
    %v404 = vpop.f32.mrf.mxu0
    %v405 = vadd.f32 %v301, %v404
    %406 = vmatmul.f32.gmra.mxu0 %v200
    %v407 = vpop.f32.mrf.mxu0
    %v408 = vadd.f32 %v304, %v407
    %409 = vdwg.mxu0
    %vm410 = vcmask 400384
    %411 = vst.msk [vmem:[%s2] sm:$0xff] %vm410, %v324
    %412 = vst.msk [vmem:[%s2 + $0x8] sm:$0xff] %vm410, %v327
    %413 = vst.msk [vmem:[%s2 + $0x10] sm:$0xff] %vm410, %v330
    %414 = vst.msk [vmem:[%s2 + $0x18] sm:$0xff] %vm410, %v333
    %415 = vst.msk [vmem:[%s2 + $0x20] sm:$0xff] %vm410, %v336
    %416 = vst.msk [vmem:[%s2 + $0x28] sm:$0xff] %vm410, %v339
    %417 = vst.msk [vmem:[%s2 + $0x30] sm:$0xff] %vm410, %v342
    %418 = vst.msk [vmem:[%s2 + $0x38] sm:$0xff] %vm410, %v345
    %419 = vst.msk [vmem:[%s2 + $0x40] sm:$0xff] %vm410, %v348
    %420 = vst.msk [vmem:[%s2 + $0x48] sm:$0xff] %vm410, %v351
    %421 = vst.msk [vmem:[%s2 + $0x50] sm:$0xff] %vm410, %v354
    %422 = vst.msk [vmem:[%s2 + $0x58] sm:$0xff] %vm410, %v357
    %423 = vst.msk [vmem:[%s2 + $0x60] sm:$0xff] %vm410, %v360
    %424 = vst.msk [vmem:[%s2 + $0x68] sm:$0xff] %vm410, %v363
    %425 = vst.msk [vmem:[%s2 + $0x70] sm:$0xff] %vm410, %v366
    %426 = vst.msk [vmem:[%s2 + $0x78] sm:$0xff] %vm410, %v369
    %427 = vst.msk [vmem:[%s2 + $0x80] sm:$0xff] %vm410, %v372
    %428 = vst.msk [vmem:[%s2 + $0x88] sm:$0xff] %vm410, %v375
    %429 = vst.msk [vmem:[%s2 + $0x90] sm:$0xff] %vm410, %v378
    %430 = vst.msk [vmem:[%s2 + $0x98] sm:$0xff] %vm410, %v381
    %431 = vst.msk [vmem:[%s2 + $0xa0] sm:$0xff] %vm410, %v384
    %432 = vst.msk [vmem:[%s2 + $0xa8] sm:$0xff] %vm410, %v387
    %433 = vst.msk [vmem:[%s2 + $0xb0] sm:$0xff] %vm410, %v390
    %434 = vst.msk [vmem:[%s2 + $0xb8] sm:$0xff] %vm410, %v393
    %435 = vst.msk [vmem:[%s2 + $0xc0] sm:$0xff] %vm410, %v396
    %436 = vst.msk [vmem:[%s2 + $0xc8] sm:$0xff] %vm410, %v399
    %437 = vst.msk [vmem:[%s2 + $0xd0] sm:$0xff] %vm410, %v402
    %438 = vst.msk [vmem:[%s2 + $0xd8] sm:$0xff] %vm410, %v405
    %439 = vst.msk [vmem:[%s2 + $0xe0] sm:$0xff] %vm410, %v408
    // Predicated region
    $region14: #{tpu_custom_call.1} parent=1 // pred_check
      _
    $region15: #{tpu_custom_call.1} parent=1 // pred_check_branch
      %441 = sbr.rel (0) target = $region17
    $region16: #{tpu_custom_call.1} parent=1 // pred_region
      _
    $region17: #{tpu_custom_call.1} parent=1 // pred_fallthru
      _
    // Predicated region
    $region18: #{tpu_custom_call.1} parent=1 // pred_check
      _
    $region19: #{tpu_custom_call.1} parent=1 // pred_check_branch
      %443 = sbr.rel (0) target = $region21
    $region20: #{tpu_custom_call.1} parent=1 // pred_region
      _
    $region21: #{tpu_custom_call.1} parent=1 // pred_fallthru
      _
    %444 = vsyncpa [#allocation3], 1

</llo_original>
